<compile_context>
chip_gen: v7x
topology: tpu7x:2x2x1
jax: 0.10.0
libtpu: 0.0.40
codegen_flags: <defaults>
</compile_context>

<pallas_src>
import jax
import jax.numpy as jnp
from jax.experimental import pallas as pl
from jax.experimental.pallas import tpu as pltpu

_SUBLANE = 8  # f32 sublane tile height


def _decoder_seq_kernel(y_ref, mask_ref, h0_ref,
                        w_ih_ref, w_hh_ref, b_ih_ref, b_hh_ref,
                        w_out_ref, b_out_ref,
                        out_ref, hdrop_ref,
                        h_scr):
    """One decoder step. grid = (batch_block, time); h carried in VMEM scratch."""
    t = pl.program_id(1)
    H = h_scr.shape[-1]

    @pl.when(t == 0)
    def _():
        h_scr[...] = h0_ref[...].astype(jnp.float32)

    h = h_scr[...]                  # (BB, H) f32 recurrent state
    y = y_ref[0]                    # (BB, F)

    # Fused input / hidden projections on the MXU, f32 accumulation.
    gi = jnp.dot(y, w_ih_ref[...], preferred_element_type=jnp.float32) + b_ih_ref[...]
    gh = jnp.dot(h.astype(w_hh_ref.dtype), w_hh_ref[...],
                 preferred_element_type=jnp.float32) + b_hh_ref[...]

    # PyTorch gate order: [reset | update | new]
    i_r, i_z, i_n = gi[:, 0:H], gi[:, H:2 * H], gi[:, 2 * H:3 * H]
    h_r, h_z, h_n = gh[:, 0:H], gh[:, H:2 * H], gh[:, 2 * H:3 * H]

    r = jax.nn.sigmoid(i_r + h_r)
    z = jax.nn.sigmoid(i_z + h_z)
    n = jnp.tanh(i_n + r * h_n)
    h_new = (1.0 - z) * n + z * h                      # (BB, H) f32

    # Linear(H, 1): N=1 matmul replaced by VPU multiply + lane reduction
    # (avoids padding an (H,1) weight to (H,128) and an MXU push/pop).
    out = jnp.sum(h_new * w_out_ref[...], axis=-1, keepdims=True) + b_out_ref[0]
    out_ref[0] = out.astype(out_ref.dtype)

    # Inverted dropout on the hidden state; the dropped hidden is both the
    # module's second output and the state fed to the next decode step.
    h_drop = h_new * mask_ref[0]
    hdrop_ref[0] = h_drop.astype(hdrop_ref.dtype)
    h_scr[...] = h_drop


def decoder_sequence_forward(h0, ys, dropout_masks, params,
                             compute_dtype=jnp.float32):
    """Run T DecoderCell steps inside a single Pallas kernel.

    h0:            (B, H)    initial hidden state
    ys:            (T, B, F) per-step decoder inputs
    dropout_masks: (T, B, H) per-step inverted-dropout masks
    Returns (outputs (T, B, 1), dropped_hiddens (T, B, H)).
    """
    T, B, F = ys.shape
    H = h0.shape[-1]

    # Pad batch to the 8-row sublane tile so every block is (8, ...)-aligned.
    BB = _SUBLANE
    B_pad = ((B + BB - 1) // BB) * BB
    if B_pad != B:
        pad = B_pad - B
        ys = jnp.pad(ys, ((0, 0), (0, pad), (0, 0)))
        dropout_masks = jnp.pad(dropout_masks, ((0, 0), (0, pad), (0, 0)))
        h0 = jnp.pad(h0, ((0, pad), (0, 0)))
    n_bb = B_pad // BB

    # Pre-transpose weights to (in, out) so the kernel does x @ W.
    # compute_dtype=bf16 is an option on v6e/v7x (MXU inputs only; gate math
    # and accumulation stay f32). Default f32 keeps parity with the reference.
    w_ih_t = params["weight_ih"].T.astype(compute_dtype)        # (F, 3H)
    w_hh_t = params["weight_hh"].T.astype(compute_dtype)        # (H, 3H)
    b_ih = params["bias_ih"].reshape(1, 3 * H).astype(jnp.float32)
    b_hh = params["bias_hh"].reshape(1, 3 * H).astype(jnp.float32)
    w_out_row = params["out_weight"].reshape(1, H).astype(jnp.float32)
    b_out = params["out_bias"].reshape(1).astype(jnp.float32)   # scalar -> SMEM
    ys = ys.astype(compute_dtype)
    dropout_masks = dropout_masks.astype(jnp.float32)
    h0 = h0.astype(jnp.float32)

    grid_spec = pltpu.PrefetchScalarGridSpec(
        num_scalar_prefetch=0,
        grid=(n_bb, T),                 # batch blocks (parallel) x time (sequential)
        in_specs=[
            pl.BlockSpec((1, BB, F), lambda b, t: (t, b, 0)),    # y_t
            pl.BlockSpec((1, BB, H), lambda b, t: (t, b, 0)),    # dropout mask_t
            pl.BlockSpec((BB, H), lambda b, t: (b, 0)),          # h0
            pl.BlockSpec((F, 3 * H), lambda b, t: (0, 0)),       # W_ih^T  (VMEM resident)
            pl.BlockSpec((H, 3 * H), lambda b, t: (0, 0)),       # W_hh^T  (VMEM resident)
            pl.BlockSpec((1, 3 * H), lambda b, t: (0, 0)),       # b_ih    (resident)
            pl.BlockSpec((1, 3 * H), lambda b, t: (0, 0)),       # b_hh    (resident)
            pl.BlockSpec((1, H), lambda b, t: (0, 0)),           # out-weight row (resident)
            pl.BlockSpec(memory_space=pltpu.MemorySpace.SMEM),   # out-bias scalar
        ],
        out_specs=(
            pl.BlockSpec((1, BB, 1), lambda b, t: (t, b, 0)),    # output_t
            pl.BlockSpec((1, BB, H), lambda b, t: (t, b, 0)),    # dropout(h_t)
        ),
        scratch_shapes=[pltpu.VMEM((BB, H), jnp.float32)],       # recurrent h carry
    )

    outs, hdrops = pl.pallas_call(
        _decoder_seq_kernel,
        out_shape=(
            jax.ShapeDtypeStruct((T, B_pad, 1), jnp.float32),
            jax.ShapeDtypeStruct((T, B_pad, H), jnp.float32),
        ),
        grid_spec=grid_spec,
        compiler_params=pltpu.CompilerParams(
            dimension_semantics=("parallel", "arbitrary")),
    )(ys, dropout_masks, h0, w_ih_t, w_hh_t, b_ih, b_hh, w_out_row, b_out)

    return outs[:, :B, :], hdrops[:, :B, :]


def decoder_cell_forward(prev_hidden, y, params, dropout_mask,
                         compute_dtype=jnp.float32):
    """Exact DecoderCell.forward: (prev_hidden (B,H), y (B,F)) -> (out (B,1), dropout(h) (B,H))."""
    outs, hdrops = decoder_sequence_forward(
        prev_hidden, y[None], dropout_mask[None], params, compute_dtype)
    return outs[0], hdrops[0]


def _init_params(key, input_feature_len, hidden_size):
    """PyTorch-style uniform(-1/sqrt(H), 1/sqrt(H)) init, deterministic."""
    ks = jax.random.split(key, 6)
    bound = 1.0 / jnp.sqrt(hidden_size)
    u = lambda k, shape: jax.random.uniform(k, shape, jnp.float32, -bound, bound)
    return {
        "weight_ih": u(ks[0], (3 * hidden_size, input_feature_len)),
        "weight_hh": u(ks[1], (3 * hidden_size, hidden_size)),
        "bias_ih": u(ks[2], (3 * hidden_size,)),
        "bias_hh": u(ks[3], (3 * hidden_size,)),
        "out_weight": u(ks[4], (1, hidden_size)),
        "out_bias": u(ks[5], (1,)),
    }


def _reference_cell(prev_hidden, y, params, dropout_mask):
    """Pure-JAX reference of the PyTorch forward (single step)."""
    H = prev_hidden.shape[-1]
    gi = y @ params["weight_ih"].T + params["bias_ih"]
    gh = prev_hidden @ params["weight_hh"].T + params["bias_hh"]
    i_r, i_z, i_n = gi[:, :H], gi[:, H:2 * H], gi[:, 2 * H:]
    h_r, h_z, h_n = gh[:, :H], gh[:, H:2 * H], gh[:, 2 * H:]
    r = jax.nn.sigmoid(i_r + h_r)
    z = jax.nn.sigmoid(i_z + h_z)
    n = jnp.tanh(i_n + r * h_n)
    h_new = (1.0 - z) * n + z * prev_hidden
    out = jnp.sum(h_new * params["out_weight"].reshape(1, H), axis=-1,
                  keepdims=True) + params["out_bias"]
    return out, h_new * dropout_mask


def _reference_sequence(h0, ys, masks, params):
    """T-step reference: the dropped hidden is fed back as the next prev_hidden."""
    def step(h, inp):
        y, m = inp
        out, h_drop = _reference_cell(h, y, params, m)
        return h_drop, (out, h_drop)
    _, (outs, hdrops) = jax.lax.scan(step, h0, (ys, masks))
    return outs, hdrops


if __name__ == "__main__":
    T = 8                # decode steps (in-kernel time loop)
    B = 2                # batch
    F = 8                # input_feature_len
    H = 32               # hidden_size
    DROPOUT_P = 0.2

    key = jax.random.PRNGKey(0)
    k_params, k_y, k_h, k_drop = jax.random.split(key, 4)

    params = _init_params(k_params, F, H)
    ys = jax.random.normal(k_y, (T, B, F), jnp.float32)
    h0 = jax.random.normal(k_h, (B, H), jnp.float32)

    # Training-mode inverted dropout masks (deterministic seed), one per step.
    keep = 1.0 - DROPOUT_P
    masks = jax.random.bernoulli(k_drop, keep, (T, B, H)).astype(jnp.float32) / keep

    # 1) Single step — exact module semantics: forward(prev_hidden, y).
    out1, h1 = decoder_cell_forward(h0, ys[0], params, masks[0])
    out1, h1 = jax.block_until_ready((out1, h1))
    ref_out1, ref_h1 = _reference_cell(h0, ys[0], params, masks[0])
    assert out1.shape == (B, 1) and h1.shape == (B, H)
    assert jnp.allclose(out1, ref_out1, atol=1e-5, rtol=1e-5)
    assert jnp.allclose(h1, ref_h1, atol=1e-5, rtol=1e-5)

    # 2) Full T-step decode inside one kernel (weights resident, h in scratch).
    outs, hdrops = decoder_sequence_forward(h0, ys, masks, params)
    outs, hdrops = jax.block_until_ready((outs, hdrops))
    ref_outs, ref_hdrops = _reference_sequence(h0, ys, masks, params)
    assert outs.shape == (T, B, 1) and hdrops.shape == (T, B, H)
    assert jnp.allclose(outs, ref_outs, atol=1e-4, rtol=1e-4)
    assert jnp.allclose(hdrops, ref_hdrops, atol=1e-4, rtol=1e-4)

    print("KERNEL_OK")
</pallas_src>

<mosaic_0001>
module attributes {stable_mosaic.version = 11 : i64} {
  func.func @_decoder_seq_kernel(%arg0: i32, %arg1: i32, %arg2: memref<1x8x8xf32, #tpu.memory_space<vmem>>, %arg3: memref<1x8x32xf32, #tpu.memory_space<vmem>>, %arg4: memref<8x32xf32, #tpu.memory_space<vmem>>, %arg5: memref<8x96xf32, #tpu.memory_space<vmem>>, %arg6: memref<32x96xf32, #tpu.memory_space<vmem>>, %arg7: memref<1x96xf32, #tpu.memory_space<vmem>>, %arg8: memref<1x96xf32, #tpu.memory_space<vmem>>, %arg9: memref<1x32xf32, #tpu.memory_space<vmem>>, %arg10: memref<1xf32, #tpu.memory_space<smem>>, %arg11: memref<1x8x1xf32, #tpu.memory_space<vmem>>, %arg12: memref<1x8x32xf32, #tpu.memory_space<vmem>>, %arg13: memref<8x32xf32, #tpu.memory_space<vmem>>) attributes {dimension_semantics = [#tpu.dimension_semantics<parallel>, #tpu.dimension_semantics<arbitrary>], iteration_bounds = array<i64: 1, 1>, scalar_prefetch = 0 : i64, scratch_operands = 1 : i64, tpu.core_type = #tpu.core_type<tc>, window_params = [{transform_indices = @transform_0, window_bounds = array<i64: 1, 8, 8>}, {transform_indices = @transform_1, window_bounds = array<i64: 1, 8, 32>}, {transform_indices = @transform_2, window_bounds = array<i64: 8, 32>}, {pipeline_mode = #tpu.pipeline_mode<synchronous>, transform_indices = @transform_3, window_bounds = array<i64: 8, 96>}, {pipeline_mode = #tpu.pipeline_mode<synchronous>, transform_indices = @transform_4, window_bounds = array<i64: 32, 96>}, {pipeline_mode = #tpu.pipeline_mode<synchronous>, transform_indices = @transform_5, window_bounds = array<i64: 1, 96>}, {pipeline_mode = #tpu.pipeline_mode<synchronous>, transform_indices = @transform_6, window_bounds = array<i64: 1, 96>}, {pipeline_mode = #tpu.pipeline_mode<synchronous>, transform_indices = @transform_7, window_bounds = array<i64: 1, 32>}, {transform_indices = @transform_8, window_bounds = array<i64: 1>}, {transform_indices = @transform_9, window_bounds = array<i64: 1, 8, 1>}, {transform_indices = @transform_10, window_bounds = array<i64: 1, 8, 32>}]} {
    %c0_i32 = arith.constant 0 : i32
    %0 = arith.cmpi eq, %arg1, %c0_i32 : i32
    %1 = arith.extui %0 : i1 to i32
    %c0_i32_0 = arith.constant 0 : i32
    %2 = arith.cmpi ne, %1, %c0_i32_0 : i32
    scf.if %2 {
      %c0_32 = arith.constant 0 : index
      %c0_33 = arith.constant 0 : index
      %60 = vector.load %arg4[%c0_32, %c0_33] : memref<8x32xf32, #tpu.memory_space<vmem>>, vector<8x32xf32>
      %c0_34 = arith.constant 0 : index
      %c0_35 = arith.constant 0 : index
      %61 = vector.load %arg13[%c0_34, %c0_35] : memref<8x32xf32, #tpu.memory_space<vmem>>, vector<8x32xf32>
      tpu.vector_store %arg13[%c0_34, %c0_35], %60 {strides = array<i32>} : memref<8x32xf32, #tpu.memory_space<vmem>>, vector<8x32xf32>,
    } else {
    }
    %c0 = arith.constant 0 : index
    %c0_1 = arith.constant 0 : index
    %3 = vector.load %arg13[%c0, %c0_1] : memref<8x32xf32, #tpu.memory_space<vmem>>, vector<8x32xf32>
    %c0_2 = arith.constant 0 : index
    %c0_3 = arith.constant 0 : index
    %c0_4 = arith.constant 0 : index
    %4 = vector.load %arg2[%c0_2, %c0_3, %c0_4] : memref<1x8x8xf32, #tpu.memory_space<vmem>>, vector<1x8x8xf32>
    %5 = vector.shape_cast %4 : vector<1x8x8xf32> to vector<8x8xf32>
    %c0_5 = arith.constant 0 : index
    %c0_6 = arith.constant 0 : index
    %6 = vector.load %arg5[%c0_5, %c0_6] : memref<8x96xf32, #tpu.memory_space<vmem>>, vector<8x96xf32>
    %cst = arith.constant dense<0.000000e+00> : vector<8x96xf32>
    %7 = tpu.matmul %5, %6, %cst {dimension_numbers = #tpu.dot_dimension_numbers<[1], [0], [0], [1], [0, 0, 1, 1], [], []>} : vector<8x8xf32>, vector<8x96xf32>, vector<8x96xf32> -> vector<8x96xf32>
    %c0_7 = arith.constant 0 : index
    %c0_8 = arith.constant 0 : index
    %8 = vector.load %arg7[%c0_7, %c0_8] : memref<1x96xf32, #tpu.memory_space<vmem>>, vector<1x96xf32>
    %9 = vector.broadcast %8 : vector<1x96xf32> to vector<8x96xf32>
    %10 = arith.addf %7, %9 : vector<8x96xf32>
    %c0_9 = arith.constant 0 : index
    %c0_10 = arith.constant 0 : index
    %11 = vector.load %arg6[%c0_9, %c0_10] : memref<32x96xf32, #tpu.memory_space<vmem>>, vector<32x96xf32>
    %cst_11 = arith.constant dense<0.000000e+00> : vector<8x96xf32>
    %12 = tpu.matmul %3, %11, %cst_11 {dimension_numbers = #tpu.dot_dimension_numbers<[1], [0], [0], [1], [0, 0, 1, 1], [], []>} : vector<8x32xf32>, vector<32x96xf32>, vector<8x96xf32> -> vector<8x96xf32>
    %c0_12 = arith.constant 0 : index
    %c0_13 = arith.constant 0 : index
    %13 = vector.load %arg8[%c0_12, %c0_13] : memref<1x96xf32, #tpu.memory_space<vmem>>, vector<1x96xf32>
    %14 = vector.broadcast %13 : vector<1x96xf32> to vector<8x96xf32>
    %15 = arith.addf %12, %14 : vector<8x96xf32>
    %16 = vector.extract_strided_slice %10 {offsets = [0, 0], sizes = [8, 32], strides = [1, 1]} : vector<8x96xf32> to vector<8x32xf32>
    %17 = vector.extract_strided_slice %10 {offsets = [0, 32], sizes = [8, 32], strides = [1, 1]} : vector<8x96xf32> to vector<8x32xf32>
    %18 = vector.extract_strided_slice %10 {offsets = [0, 64], sizes = [8, 32], strides = [1, 1]} : vector<8x96xf32> to vector<8x32xf32>
    %19 = vector.extract_strided_slice %15 {offsets = [0, 0], sizes = [8, 32], strides = [1, 1]} : vector<8x96xf32> to vector<8x32xf32>
    %20 = vector.extract_strided_slice %15 {offsets = [0, 32], sizes = [8, 32], strides = [1, 1]} : vector<8x96xf32> to vector<8x32xf32>
    %21 = vector.extract_strided_slice %15 {offsets = [0, 64], sizes = [8, 32], strides = [1, 1]} : vector<8x96xf32> to vector<8x32xf32>
    %22 = arith.addf %16, %19 : vector<8x32xf32>
    %23 = arith.negf %22 : vector<8x32xf32>
    %24 = math.exp %23 : vector<8x32xf32>
    %cst_14 = arith.constant 1.000000e+00 : f32
    %25 = vector.broadcast %cst_14 : f32 to vector<8x32xf32>
    %26 = arith.addf %25, %24 : vector<8x32xf32>
    %27 = arith.divf %25, %26 : vector<8x32xf32>
    %28 = arith.addf %17, %20 : vector<8x32xf32>
    %29 = arith.negf %28 : vector<8x32xf32>
    %30 = math.exp %29 : vector<8x32xf32>
    %cst_15 = arith.constant 1.000000e+00 : f32
    %31 = vector.broadcast %cst_15 : f32 to vector<8x32xf32>
    %32 = arith.addf %31, %30 : vector<8x32xf32>
    %33 = arith.divf %31, %32 : vector<8x32xf32>
    %34 = arith.mulf %27, %21 : vector<8x32xf32>
    %35 = arith.addf %18, %34 : vector<8x32xf32>
    %36 = math.tanh %35 : vector<8x32xf32>
    %cst_16 = arith.constant 1.000000e+00 : f32
    %37 = vector.broadcast %cst_16 : f32 to vector<8x32xf32>
    %38 = arith.subf %37, %33 : vector<8x32xf32>
    %39 = arith.mulf %38, %36 : vector<8x32xf32>
    %40 = arith.mulf %33, %3 : vector<8x32xf32>
    %41 = arith.addf %39, %40 : vector<8x32xf32>
    %c0_17 = arith.constant 0 : index
    %c0_18 = arith.constant 0 : index
    %42 = vector.load %arg9[%c0_17, %c0_18] : memref<1x32xf32, #tpu.memory_space<vmem>>, vector<1x32xf32>
    %43 = vector.broadcast %42 : vector<1x32xf32> to vector<8x32xf32>
    %44 = arith.mulf %41, %43 : vector<8x32xf32>
    %cst_19 = arith.constant dense<0.000000e+00> : vector<8xf32>
    %45 = vector.multi_reduction <add>, %44, %cst_19 [1] : vector<8x32xf32> to vector<8xf32>
    %46 = vector.shape_cast %45 : vector<8xf32> to vector<8x1xf32>
    %c0_20 = arith.constant 0 : index
    %47 = memref.load %arg10[%c0_20] : memref<1xf32, #tpu.memory_space<smem>>
    %48 = vector.broadcast %47 : f32 to vector<8x1xf32>
    %49 = arith.addf %46, %48 : vector<8x1xf32>
    %c0_21 = arith.constant 0 : index
    %c0_22 = arith.constant 0 : index
    %c0_23 = arith.constant 0 : index
    %50 = vector.load %arg11[%c0_21, %c0_22, %c0_23] : memref<1x8x1xf32, #tpu.memory_space<vmem>>, vector<1x8x1xf32>
    %51 = vector.shape_cast %50 : vector<1x8x1xf32> to vector<8x1xf32>
    %52 = vector.shape_cast %49 : vector<8x1xf32> to vector<1x8x1xf32>
    tpu.vector_store %arg11[%c0_21, %c0_22, %c0_23], %52 {strides = array<i32>} : memref<1x8x1xf32, #tpu.memory_space<vmem>>, vector<1x8x1xf32>,
    %c0_24 = arith.constant 0 : index
    %c0_25 = arith.constant 0 : index
    %c0_26 = arith.constant 0 : index
    %53 = vector.load %arg3[%c0_24, %c0_25, %c0_26] : memref<1x8x32xf32, #tpu.memory_space<vmem>>, vector<1x8x32xf32>
    %54 = vector.shape_cast %53 : vector<1x8x32xf32> to vector<8x32xf32>
    %55 = arith.mulf %41, %54 : vector<8x32xf32>
    %c0_27 = arith.constant 0 : index
    %c0_28 = arith.constant 0 : index
    %c0_29 = arith.constant 0 : index
    %56 = vector.load %arg12[%c0_27, %c0_28, %c0_29] : memref<1x8x32xf32, #tpu.memory_space<vmem>>, vector<1x8x32xf32>
    %57 = vector.shape_cast %56 : vector<1x8x32xf32> to vector<8x32xf32>
    %58 = vector.shape_cast %55 : vector<8x32xf32> to vector<1x8x32xf32>
    tpu.vector_store %arg12[%c0_27, %c0_28, %c0_29], %58 {strides = array<i32>} : memref<1x8x32xf32, #tpu.memory_space<vmem>>, vector<1x8x32xf32>,
    %c0_30 = arith.constant 0 : index
    %c0_31 = arith.constant 0 : index
    %59 = vector.load %arg13[%c0_30, %c0_31] : memref<8x32xf32, #tpu.memory_space<vmem>>, vector<8x32xf32>
    tpu.vector_store %arg13[%c0_30, %c0_31], %55 {strides = array<i32>} : memref<8x32xf32, #tpu.memory_space<vmem>>, vector<8x32xf32>,
    return
  }
  func.func @transform_0(%arg0: i32, %arg1: i32) -> (i32, i32, i32) {
    %c0_i32 = arith.constant 0 : i32
    %c0_i32_0 = arith.constant 0 : i32
    return %arg1, %arg0, %c0_i32 : i32, i32, i32
  }
  func.func @transform_1(%arg0: i32, %arg1: i32) -> (i32, i32, i32) {
    %c0_i32 = arith.constant 0 : i32
    %c0_i32_0 = arith.constant 0 : i32
    return %arg1, %arg0, %c0_i32 : i32, i32, i32
  }
  func.func @transform_2(%arg0: i32, %arg1: i32) -> (i32, i32) {
    %c0_i32 = arith.constant 0 : i32
    %c0_i32_0 = arith.constant 0 : i32
    return %arg0, %c0_i32 : i32, i32
  }
  func.func @transform_3(%arg0: i32, %arg1: i32) -> (i32, i32) {
    %c0_i32 = arith.constant 0 : i32
    %c0_i32_0 = arith.constant 0 : i32
    %c0_i32_1 = arith.constant 0 : i32
    return %c0_i32, %c0_i32_0 : i32, i32
  }
  func.func @transform_4(%arg0: i32, %arg1: i32) -> (i32, i32) {
    %c0_i32 = arith.constant 0 : i32
    %c0_i32_0 = arith.constant 0 : i32
    %c0_i32_1 = arith.constant 0 : i32
    return %c0_i32, %c0_i32_0 : i32, i32
  }
  func.func @transform_5(%arg0: i32, %arg1: i32) -> (i32, i32) {
    %c0_i32 = arith.constant 0 : i32
    %c0_i32_0 = arith.constant 0 : i32
    %c0_i32_1 = arith.constant 0 : i32
    return %c0_i32, %c0_i32_0 : i32, i32
  }
  func.func @transform_6(%arg0: i32, %arg1: i32) -> (i32, i32) {
    %c0_i32 = arith.constant 0 : i32
    %c0_i32_0 = arith.constant 0 : i32
    %c0_i32_1 = arith.constant 0 : i32
    return %c0_i32, %c0_i32_0 : i32, i32
  }
  func.func @transform_7(%arg0: i32, %arg1: i32) -> (i32, i32) {
    %c0_i32 = arith.constant 0 : i32
    %c0_i32_0 = arith.constant 0 : i32
    %c0_i32_1 = arith.constant 0 : i32
    return %c0_i32, %c0_i32_0 : i32, i32
  }
  func.func @transform_8(%arg0: i32, %arg1: i32) -> i32 {
    %c0_i32 = arith.constant 0 : i32
    %c0_i32_0 = arith.constant 0 : i32
    return %c0_i32 : i32
  }
  func.func @transform_9(%arg0: i32, %arg1: i32) -> (i32, i32, i32) {
    %c0_i32 = arith.constant 0 : i32
    %c0_i32_0 = arith.constant 0 : i32
    return %arg1, %arg0, %c0_i32 : i32, i32, i32
  }
  func.func @transform_10(%arg0: i32, %arg1: i32) -> (i32, i32, i32) {
    %c0_i32 = arith.constant 0 : i32
    %c0_i32_0 = arith.constant 0 : i32
    return %arg1, %arg0, %c0_i32 : i32, i32, i32
  }
}

</mosaic_0001>

<llo_original>
// kernel: tpu_custom_call.1
$region0: #{tpu_custom_call.1}
  #allocation0 [shape = 'u32[]', space=smem, size = 0x4, offset = 0x4, fixed_abs, tag = 'smem constant byte address 0x4 - core index']
  #allocation1 [shape = 'u32[144,128]{1,0:T(1,128)}', space=vmem, size = 0x12000, scoped, tag = 'internal scratch']
  #allocation2 [shape = 'f32[8,32]{1,0:T(8,128)}', space=vmem, size = 0x1000, scoped, tag = 'scratch operand']
  #allocation3 [shape = 'f32[1]{0:T(128)S(6)}', space=smem, size = 0x200, scoped, tag = 'scoped memory for tpu_custom_call.1']
  %s0 = inlined_call_operand.hbm [shape: f32[1,8,8], index: 0, kind: input, shape index: {}]
  %s1 = inlined_call_operand.hbm [shape: f32[1,8,32], index: 1, kind: input, shape index: {}]
  %s2 = inlined_call_operand.vmem [shape: f32[8,32], index: 2, kind: input, shape index: {}]
  %s3 = inlined_call_operand.hbm [shape: f32[8,96], index: 3, kind: input, shape index: {}]
  %s4 = inlined_call_operand.hbm [shape: f32[32,96], index: 4, kind: input, shape index: {}]
  %s5 = inlined_call_operand.vmem [shape: f32[1,96], index: 5, kind: input, shape index: {}]
  %s6 = inlined_call_operand.vmem [shape: f32[1,96], index: 6, kind: input, shape index: {}]
  %s7 = inlined_call_operand.vmem [shape: f32[1,32], index: 7, kind: input, shape index: {}]
  %s8 = inlined_call_operand.<no memory space> [shape: f32[1], index: 8, kind: input, shape index: {}]
  %s9 = inlined_call_operand.vmem [shape: f32[1,8,1], index: 9, kind: output, shape index: {0}]
  %s10 = inlined_call_operand.hbm [shape: f32[1,8,32], index: 10, kind: output, shape index: {1}]
  %11 = xla_tuple %s9, %s10
  %s12 = sld [smem:[#allocation0]]
  $region74: #{tpu_custom_call.1} parent=0
    _
  %s14 = ssub.s32 1, %s12
  %s15 = scalar_select 0, %s14, %s12
  %16 = sst [smem:[#allocation3]] %s8
  $region1: #{tpu_custom_call.1} parent=0
    #allocation4 [shape = 'u8[4096]{0}', space=vmem, size = 0x1000, scoped, tag = 'input window, operand 0, single buffered']
    #allocation5 [shape = 's32[1]{0}', space=sflag, size = 0x4, scoped, tag = 'scoped memory for tpu_custom_call.1']
    #allocation6 [shape = 's32[1]{0}', space=sflag, size = 0x4, scoped, tag = 'scoped memory for tpu_custom_call.1']
    #allocation7 [shape = 'u8[4096]{0}', space=vmem, size = 0x1000, scoped, tag = 'input window, operand 1, single buffered']
    #allocation8 [shape = 's32[1]{0}', space=sflag, size = 0x4, scoped, tag = 'scoped memory for tpu_custom_call.1']
    #allocation9 [shape = 'u8[4096]{0}', space=vmem, size = 0x1000, scoped, tag = 'input window, operand 3, single buffered']
    #allocation10 [shape = 'u8[16384]{0}', space=vmem, size = 0x4000, scoped, tag = 'input window, operand 4, single buffered']
    #allocation11 [shape = 's32[1]{0}', space=sflag, size = 0x4, scoped, tag = 'scoped memory for tpu_custom_call.1']
    #allocation12 [shape = 'u8[4096]{0}', space=vmem, size = 0x1000, scoped, tag = 'output window, operand 1, single buffered']
    %17 = vsyncpa [#allocation5], 0
    %18 = vsyncpa [#allocation8], 0
    %19 = vsyncpa [#allocation11], 0
    %20 = vsyncpa [#allocation6], 0
    // Predicated region
    $region2: #{tpu_custom_call.1} parent=1 // pred_check
      _
    $region3: #{tpu_custom_call.1} parent=1 // pred_check_branch
      %22 = sbr.rel (0) target = $region5
    $region4: #{tpu_custom_call.1} parent=1 // pred_region
      %s24 = ssub.s32 128, 128
      %25 = vsyncadd [#allocation5], %s24
      %s27 = sshll.u32 [#allocation4], 4
      %s28 = int_to_ptr.vmem [resolvable:$true] %s27
      %30 = dma.hbm_to_vmem [thread:$0]  %s0, 128, %s28, [#allocation5]
    $region5: #{tpu_custom_call.1} parent=1 // pred_fallthru
      _
    // Predicated region
    $region6: #{tpu_custom_call.1} parent=1 // pred_check
      _
    $region7: #{tpu_custom_call.1} parent=1 // pred_check_branch
      %32 = sbr.rel (0) target = $region9
    $region8: #{tpu_custom_call.1} parent=1 // pred_region
      %s34 = ssub.s32 128, 128
      %35 = vsyncadd [#allocation8], %s34
      %s37 = sshll.u32 [#allocation7], 4
      %s38 = int_to_ptr.vmem [resolvable:$true] %s37
      %40 = dma.hbm_to_vmem [thread:$0]  %s1, 128, %s38, [#allocation8]
    $region9: #{tpu_custom_call.1} parent=1 // pred_fallthru
      _
    // Predicated region
    $region10: #{tpu_custom_call.1} parent=1 // pred_check
      _
    $region11: #{tpu_custom_call.1} parent=1 // pred_check_branch
      %42 = sbr.rel (0) target = $region13
    $region12: #{tpu_custom_call.1} parent=1 // pred_region
      _
    $region13: #{tpu_custom_call.1} parent=1 // pred_fallthru
      _
    // Predicated region
    $region14: #{tpu_custom_call.1} parent=1 // pred_check
      _
    $region15: #{tpu_custom_call.1} parent=1 // pred_check_branch
      %44 = sbr.rel (0) target = $region17
    $region16: #{tpu_custom_call.1} parent=1 // pred_region
      %s46 = ssub.s32 128, 128
      %47 = vsyncadd [#allocation8], %s46
      %s49 = sshll.u32 [#allocation9], 4
      %s50 = int_to_ptr.vmem [resolvable:$true] %s49
      %52 = dma.hbm_to_vmem [thread:$0]  %s3, 128, %s50, [#allocation8]
    $region17: #{tpu_custom_call.1} parent=1 // pred_fallthru
      _
    // Predicated region
    $region18: #{tpu_custom_call.1} parent=1 // pred_check
      _
    $region19: #{tpu_custom_call.1} parent=1 // pred_check_branch
      %54 = sbr.rel (0) target = $region21
    $region20: #{tpu_custom_call.1} parent=1 // pred_region
      %s56 = ssub.s32 512, 512
      %57 = vsyncadd [#allocation11], %s56
      %s58 = sshll.u32 [#allocation10], 4
      %s59 = int_to_ptr.vmem [resolvable:$true] %s58
      %64 = dma.hbm_to_vmem [thread:$0]  %s4, 512, %s59, [#allocation11], 128, 128, 8
    $region21: #{tpu_custom_call.1} parent=1 // pred_fallthru
      _
    // Predicated region
    $region22: #{tpu_custom_call.1} parent=1 // pred_check
      _
    $region23: #{tpu_custom_call.1} parent=1 // pred_check_branch
      %66 = sbr.rel (0) target = $region25
    $region24: #{tpu_custom_call.1} parent=1 // pred_region
      _
    $region25: #{tpu_custom_call.1} parent=1 // pred_fallthru
      _
    // Predicated region
    $region26: #{tpu_custom_call.1} parent=1 // pred_check
      _
    $region27: #{tpu_custom_call.1} parent=1 // pred_check_branch
      %68 = sbr.rel (0) target = $region29
    $region28: #{tpu_custom_call.1} parent=1 // pred_region
      _
    $region29: #{tpu_custom_call.1} parent=1 // pred_fallthru
      _
    // Predicated region
    $region30: #{tpu_custom_call.1} parent=1 // pred_check
      _
    $region31: #{tpu_custom_call.1} parent=1 // pred_check_branch
      %70 = sbr.rel (0) target = $region33
    $region32: #{tpu_custom_call.1} parent=1 // pred_region
      _
    $region33: #{tpu_custom_call.1} parent=1 // pred_fallthru
      _
    // Predicated region
    $region34: #{tpu_custom_call.1} parent=1 // pred_check
      _
    $region35: #{tpu_custom_call.1} parent=1 // pred_check_branch
      %72 = sbr.rel (0) target = $region37
    $region36: #{tpu_custom_call.1} parent=1 // pred_region
      _
    $region37: #{tpu_custom_call.1} parent=1 // pred_fallthru
      _
    // Predicated region
    $region38: #{tpu_custom_call.1} parent=1 // pred_check
      _
    $region39: #{tpu_custom_call.1} parent=1 // pred_check_branch
      %74 = sbr.rel (0) target = $region41
    $region40: #{tpu_custom_call.1} parent=1 // pred_region
      %75 = dma.done [#allocation5], 128
    $region41: #{tpu_custom_call.1} parent=1 // pred_fallthru
      _
    // Predicated region
    $region42: #{tpu_custom_call.1} parent=1 // pred_check
      _
    $region43: #{tpu_custom_call.1} parent=1 // pred_check_branch
      %77 = sbr.rel (0) target = $region45
    $region44: #{tpu_custom_call.1} parent=1 // pred_region
      %78 = dma.done [#allocation8], 128
    $region45: #{tpu_custom_call.1} parent=1 // pred_fallthru
      _
    // Predicated region
    $region46: #{tpu_custom_call.1} parent=1 // pred_check
      _
    $region47: #{tpu_custom_call.1} parent=1 // pred_check_branch
      %80 = sbr.rel (0) target = $region49
    $region48: #{tpu_custom_call.1} parent=1 // pred_region
      %81 = dma.done [#allocation8], 128
    $region49: #{tpu_custom_call.1} parent=1 // pred_fallthru
      _
    // Predicated region
    $region50: #{tpu_custom_call.1} parent=1 // pred_check
      _
    $region51: #{tpu_custom_call.1} parent=1 // pred_check_branch
      %83 = sbr.rel (0) target = $region53
    $region52: #{tpu_custom_call.1} parent=1 // pred_region
      %84 = dma.done [#allocation11], 512
    $region53: #{tpu_custom_call.1} parent=1 // pred_fallthru
      _
    %p85 = scmp.eq.s32.totalorder 0, 0
    // Predicated region
    $region54: #{tpu_custom_call.1} parent=1 // pred_check
      %p86 = pneg %p85
    $region55: #{tpu_custom_call.1} parent=1 // pred_check_branch
      %88 = sbr.rel (%p86) target = $region57
    $region56: #{tpu_custom_call.1} parent=1 // pred_region
      %v89 = vld [vmem:[%s2] sm:$0xff]
      %vm90 = vcmask 261120
      %91 = vst.msk [vmem:[#allocation2] sm:$0xff] %vm90, %v89
    $region57: #{tpu_custom_call.1} parent=1 // pred_fallthru
      _
    %v92 = vld [vmem:[#allocation2] sm:$0xff]
    %v93 = vld [vmem:[#allocation4] sm:$0xff]
    %v94 = vld [vmem:[#allocation9] sm:$0xff]
    %v95 = vld [vmem:[%s5] sm:$0x1]
    %v97 = vlaneseq
    %v98 = vshrl.u32 %v97, 7
    %v99 = vsub.s32 0, %v98
    %v100 = vrot.slane %v95, %v99
    %vm102 = vcmask 64512
    %v104 = vsel %vm102, %v93, 0
    %106 = vmatprep.subr.mxu0 0.0
    %107 = vmatpush1.msra.mxu0 %v94
    %108 = vmatprep.subr.mxu0 0.0
    %109 = vmatpush1.msra.mxu0 0.0
    %110 = vmatprep.subr.mxu0 0.0
    %111 = vmatpush1.msra.mxu0 0.0
    %112 = vmatprep.subr.mxu0 0.0
    %113 = vmatpush1.msra.mxu0 0.0
    %114 = vmatprep.subr.mxu0 0.0
    %115 = vmatpush1.msra.mxu0 0.0
    %116 = vmatprep.subr.mxu0 0.0
    %117 = vmatpush1.msra.mxu0 0.0
    %118 = vmatprep.subr.mxu0 0.0
    %119 = vmatpush1.msra.mxu0 0.0
    %120 = vmatprep.subr.mxu0 0.0
    %121 = vmatpush1.msra.mxu0 0.0
    %122 = vmatprep.subr.mxu0 0.0
    %123 = vmatpush1.msra.mxu0 0.0
    %124 = vmatprep.subr.mxu0 0.0
    %125 = vmatpush1.msra.mxu0 0.0
    %126 = vmatprep.subr.mxu0 0.0
    %127 = vmatpush1.msra.mxu0 0.0
    %128 = vmatprep.subr.mxu0 0.0
    %129 = vmatpush1.msra.mxu0 0.0
    %130 = vmatprep.subr.mxu0 0.0
    %131 = vmatpush1.msra.mxu0 0.0
    %132 = vmatprep.subr.mxu0 0.0
    %133 = vmatpush1.msra.mxu0 0.0
    %134 = vmatprep.subr.mxu0 0.0
    %135 = vmatpush1.msra.mxu0 0.0
    %136 = vmatprep.subr.mxu0 0.0
    %137 = vmatpush1.msra.mxu0 0.0
    %138 = vmatprep.subr.mxu0 0.0
    %139 = vmatpush1.msra.mxu0 0.0
    %140 = vmatprep.subr.mxu0 0.0
    %141 = vmatpush1.msra.mxu0 0.0
    %142 = vmatprep.subr.mxu0 0.0
    %143 = vmatpush1.msra.mxu0 0.0
    %144 = vmatprep.subr.mxu0 0.0
    %145 = vmatpush1.msra.mxu0 0.0
    %146 = vmatprep.subr.mxu0 0.0
    %147 = vmatpush1.msra.mxu0 0.0
    %148 = vmatprep.subr.mxu0 0.0
    %149 = vmatpush1.msra.mxu0 0.0
    %150 = vmatprep.subr.mxu0 0.0
    %151 = vmatpush1.msra.mxu0 0.0
    %152 = vmatprep.subr.mxu0 0.0
    %153 = vmatpush1.msra.mxu0 0.0
    %154 = vmatprep.subr.mxu0 0.0
    %155 = vmatpush1.msra.mxu0 0.0
    %156 = vmatprep.subr.mxu0 0.0
    %157 = vmatpush1.msra.mxu0 0.0
    %158 = vmatprep.subr.mxu0 0.0
    %159 = vmatpush1.msra.mxu0 0.0
    %160 = vmatprep.subr.mxu0 0.0
    %161 = vmatpush1.msra.mxu0 0.0
    %162 = vmatprep.subr.mxu0 0.0
    %163 = vmatpush1.msra.mxu0 0.0
    %164 = vmatprep.subr.mxu0 0.0
    %165 = vmatpush1.msra.mxu0 0.0
    %166 = vmatprep.subr.mxu0 0.0
    %167 = vmatpush1.msra.mxu0 0.0
    %168 = vmatprep.subr.mxu0 0.0
    %169 = vmatpush1.msra.mxu0 0.0
    %170 = vmatprep.mubr.f32.mxu0 0.0
    %171 = vmatmul.mubr.f32.gmra.mrb[0].mxu0 %v104
    %v172 = vpop.f32.mrb[0].mxu0
    %v173 = vadd.f32 %v100, %v172
    %v174 = vpop.f32.mrb[0].mxu0
    %175 = vdwg.mxu0
    %v176 = vld [vmem:[#allocation10] sm:$0xff]
    %v177 = vld [vmem:[#allocation10 + $0x8] sm:$0xff]
    %v178 = vld [vmem:[#allocation10 + $0x10] sm:$0xff]
    %v179 = vld [vmem:[#allocation10 + $0x18] sm:$0xff]
    %v180 = vld [vmem:[%s6] sm:$0x1]
    %v182 = vlaneseq
    %v183 = vshrl.u32 %v182, 7
    %v184 = vsub.s32 0, %v183
    %v185 = vrot.slane %v180, %v184
    %vm187 = vcmask 261120
    %v189 = vsel %vm187, %v92, 0
    %191 = vmatprep.subr.mxu0 0.0
    %192 = vmatpush1.msra.mxu0 %v176
    %193 = vmatprep.subr.mxu0 0.0
    %194 = vmatpush1.msra.mxu0 %v177
    %195 = vmatprep.subr.mxu0 0.0
    %196 = vmatpush1.msra.mxu0 %v178
    %197 = vmatprep.subr.mxu0 0.0
    %198 = vmatpush1.msra.mxu0 %v179
    %199 = vmatprep.subr.mxu0 0.0
    %200 = vmatpush1.msra.mxu0 0.0
    %201 = vmatprep.subr.mxu0 0.0
    %202 = vmatpush1.msra.mxu0 0.0
    %203 = vmatprep.subr.mxu0 0.0
    %204 = vmatpush1.msra.mxu0 0.0
    %205 = vmatprep.subr.mxu0 0.0
    %206 = vmatpush1.msra.mxu0 0.0
    %207 = vmatprep.subr.mxu0 0.0
    %208 = vmatpush1.msra.mxu0 0.0
    %209 = vmatprep.subr.mxu0 0.0
    %210 = vmatpush1.msra.mxu0 0.0
    %211 = vmatprep.subr.mxu0 0.0
    %212 = vmatpush1.msra.mxu0 0.0
    %213 = vmatprep.subr.mxu0 0.0
    %214 = vmatpush1.msra.mxu0 0.0
    %215 = vmatprep.subr.mxu0 0.0
    %216 = vmatpush1.msra.mxu0 0.0
    %217 = vmatprep.subr.mxu0 0.0
    %218 = vmatpush1.msra.mxu0 0.0
    %219 = vmatprep.subr.mxu0 0.0
    %220 = vmatpush1.msra.mxu0 0.0
    %221 = vmatprep.subr.mxu0 0.0
    %222 = vmatpush1.msra.mxu0 0.0
    %223 = vmatprep.subr.mxu0 0.0
    %224 = vmatpush1.msra.mxu0 0.0
    %225 = vmatprep.subr.mxu0 0.0
    %226 = vmatpush1.msra.mxu0 0.0
    %227 = vmatprep.subr.mxu0 0.0
    %228 = vmatpush1.msra.mxu0 0.0
    %229 = vmatprep.subr.mxu0 0.0
    %230 = vmatpush1.msra.mxu0 0.0
    %231 = vmatprep.subr.mxu0 0.0
    %232 = vmatpush1.msra.mxu0 0.0
    %233 = vmatprep.subr.mxu0 0.0
    %234 = vmatpush1.msra.mxu0 0.0
    %235 = vmatprep.subr.mxu0 0.0
    %236 = vmatpush1.msra.mxu0 0.0
    %237 = vmatprep.subr.mxu0 0.0
    %238 = vmatpush1.msra.mxu0 0.0
    %239 = vmatprep.subr.mxu0 0.0
    %240 = vmatpush1.msra.mxu0 0.0
    %241 = vmatprep.subr.mxu0 0.0
    %242 = vmatpush1.msra.mxu0 0.0
    %243 = vmatprep.subr.mxu0 0.0
    %244 = vmatpush1.msra.mxu0 0.0
    %245 = vmatprep.subr.mxu0 0.0
    %246 = vmatpush1.msra.mxu0 0.0
    %247 = vmatprep.subr.mxu0 0.0
    %248 = vmatpush1.msra.mxu0 0.0
    %249 = vmatprep.subr.mxu0 0.0
    %250 = vmatpush1.msra.mxu0 0.0
    %251 = vmatprep.subr.mxu0 0.0
    %252 = vmatpush1.msra.mxu0 0.0
    %253 = vmatprep.subr.mxu0 0.0
    %254 = vmatpush1.msra.mxu0 0.0
    %255 = vmatprep.mubr.f32.mxu0 0.0
    %256 = vmatmul.mubr.f32.gmra.mrb[0].mxu0 %v189
    %v257 = vpop.f32.mrb[0].mxu0
    %v258 = vadd.f32 %v185, %v257
    %v259 = vpop.f32.mrb[0].mxu0
    %260 = vdwg.mxu0
    %v261 = vadd.f32 %v173, %v258
    %v262 = vxor.u32 %v261, 2147483648
    %v263 = vmul.f32 %v262, 1.442695
    %v264 = vpow.pop %v263
    %v265 = vadd.f32 %v264, 1.0
    %v266 = vrcp.pop %v265
    %v267 = vmul.f32 1.0, %v266
    %269 = vrot.lane.b32.xlu0 %v258, 64
    %v270 = vpop.permute.xlu0 %269
    %v272 = vmul.f32 %v267, %v270
    %274 = vrot.lane.b32.xlu0 %v272, 64
    %v275 = vpop.permute.xlu0 %274
    %v277 = vadd.f32 %v173, %v275
    %v278 = vtanh.pop %v277
    %v279 = vsub.f32 1.0, %v267
    %281 = vrot.lane.b32.xlu0 %v278, 96
    %v282 = vpop.permute.xlu0 %281
    %v284 = vmul.f32 %v279, %v282
    %285 = vrot.lane.b32.xlu0 %v92, 32
    %v286 = vpop.permute.xlu0 %285
    %v288 = vmul.f32 %v267, %v286
    %v289 = vadd.f32 %v284, %v288
    %v290 = vld [vmem:[%s7] sm:$0x1]
    %v292 = vlaneseq
    %v293 = vshrl.u32 %v292, 7
    %v294 = vsub.s32 0, %v293
    %v295 = vrot.slane %v290, %v294
    %296 = vrot.lane.b32.xlu0 %v295, 32
    %v297 = vpop.permute.xlu0 %296
    %v299 = vmul.f32 %v289, %v297
    %301 = vrot.lane.b32.xlu0 %v299, 96
    %v302 = vpop.permute.xlu0 %301
    %v304 = vsel %vm187, %v302, 0.0
    %305 = vadd.xlane.f32.xlu0 %v304
    %v306 = vpop.xlane.xlu0 %305
    %s307 = sld [smem:[#allocation3]]
    %v308 = vstv %s307
    %v309 = vadd.f32 %v306, %v308
    %vm310 = vcmask 7168
    %311 = vst.msk [vmem:[%s9] sm:$0xff] %vm310, %v309
    %v312 = vld [vmem:[#allocation7] sm:$0xff]
    %314 = vrot.lane.b32.xlu0 %v312, 32
    %v315 = vpop.permute.xlu0 %314
    %v317 = vmul.f32 %v289, %v315
    %319 = vrot.lane.b32.xlu0 %v317, 96
    %v320 = vpop.permute.xlu0 %319
    %322 = vst.msk [vmem:[#allocation12] sm:$0xff] %vm187, %v320
    %323 = vst.msk [vmem:[#allocation2] sm:$0xff] %vm187, %v320
    // Predicated region
    $region58: #{tpu_custom_call.1} parent=1 // pred_check
      _
    $region59: #{tpu_custom_call.1} parent=1 // pred_check_branch
      %325 = sbr.rel (0) target = $region61
    $region60: #{tpu_custom_call.1} parent=1 // pred_region
      _
    $region61: #{tpu_custom_call.1} parent=1 // pred_fallthru
      _
    // Predicated region
    $region62: #{tpu_custom_call.1} parent=1 // pred_check
      _
    $region63: #{tpu_custom_call.1} parent=1 // pred_check_branch
      %327 = sbr.rel (0) target = $region65
    $region64: #{tpu_custom_call.1} parent=1 // pred_region
      %s329 = ssub.s32 128, 128
      %330 = vsyncadd [#allocation6], %s329
      %s332 = sshll.u32 [#allocation12], 4
      %s333 = int_to_ptr.vmem [resolvable:$true] %s332
      %335 = dma.vmem_to_hbm [thread:$0]  %s333, 128, %s10, [#allocation6]
    $region65: #{tpu_custom_call.1} parent=1 // pred_fallthru
      _
    // Predicated region
    $region66: #{tpu_custom_call.1} parent=1 // pred_check
      _
    $region67: #{tpu_custom_call.1} parent=1 // pred_check_branch
      %337 = sbr.rel (0) target = $region69
    $region68: #{tpu_custom_call.1} parent=1 // pred_region
      _
    $region69: #{tpu_custom_call.1} parent=1 // pred_fallthru
      _
    // Predicated region
    $region70: #{tpu_custom_call.1} parent=1 // pred_check
      _
    $region71: #{tpu_custom_call.1} parent=1 // pred_check_branch
      %339 = sbr.rel (0) target = $region73
    $region72: #{tpu_custom_call.1} parent=1 // pred_region
      %340 = dma.done [#allocation6], 128
    $region73: #{tpu_custom_call.1} parent=1 // pred_fallthru
      _
    %341 = vsyncpa [#allocation5], 1
    %342 = vsyncpa [#allocation8], 1
    %343 = vsyncpa [#allocation11], 1
    %344 = vsyncpa [#allocation6], 1

</llo_original>
